<compile_context>
chip_gen: v6e
topology: v6e:2x2x1
jax: 0.10.0
libtpu: 0.0.40
codegen_flags: <defaults>
</compile_context>

<pallas_src>
import functools

import jax
import jax.numpy as jnp
from jax import lax
from jax.experimental import pallas as pl
from jax.experimental.pallas import tpu as pltpu


def _gaussian_smearing_kernel(dist_ref, out_ref, *, start, step, coeff, num_gaussians):
    # dist_ref: (TILE_N, 1) f32 VMEM ;  out_ref: (TILE_N, G) f32 VMEM
    # Offset row built in-kernel: integer iota -> f32 FMA (a couple of VPU ops
    # that co-issue for free under the store/DMA bottleneck).
    lanes = lax.broadcasted_iota(jnp.int32, (1, num_gaussians), 1).astype(jnp.float32)
    offset = start + step * lanes                      # (1, G)
    d = dist_ref[...] - offset                         # broadcast -> (TILE_N, G)
    out_ref[...] = jnp.exp(coeff * d * d)


def _round_up(x, m):
    return ((x + m - 1) // m) * m


def gaussian_smearing(dist, *, start=0.0, stop=5.0, num_gaussians=50, tile_n=8192):
    """dist: any-shaped float array of distances. Returns (N, num_gaussians) f32."""
    step = (stop - start) / (num_gaussians - 1)
    coeff = -0.5 / (step ** 2)                         # matches (offset[1]-offset[0]).item()**2

    dist_flat = jnp.reshape(dist, (-1, 1)).astype(jnp.float32)   # (N, 1)
    n = dist_flat.shape[0]

    # --- tile selection -----------------------------------------------------
    # Big tiles amortize the ~0.35 us per-step grid overhead.  Cap by the
    # (128-aligned) problem size so tiny graphs don't allocate huge buffers.
    # No padding / slicing: grid = cdiv(n, tile) and Pallas masks the ragged
    # trailing block (writes past row n are discarded).
    tile = min(int(tile_n), _round_up(n, 128))
    grid = pl.cdiv(n, tile)
    # VMEM per step (lane-padded to 128): input (tile,1)->tile*512 B and
    # output (tile,50)->tile*512 B, x2 buffers each => ~16 MiB at tile=8192.
    # Set the scoped-VMEM limit explicitly so this fits on v5e (16 MiB
    # default) and stays well under v7x's 64 MiB physical per TensorCore.

    kernel = functools.partial(
        _gaussian_smearing_kernel,
        start=float(start),
        step=float(step),
        coeff=float(coeff),
        num_gaussians=num_gaussians,
    )

    out = pl.pallas_call(
        kernel,
        out_shape=jax.ShapeDtypeStruct((n, num_gaussians), jnp.float32),
        grid_spec=pltpu.PrefetchScalarGridSpec(
            num_scalar_prefetch=0,
            grid=(grid,),
            in_specs=[
                pl.BlockSpec((tile, 1), lambda i: (i, 0)),
            ],
            out_specs=pl.BlockSpec((tile, num_gaussians), lambda i: (i, 0)),
        ),
        compiler_params=pltpu.CompilerParams(
            dimension_semantics=("parallel",),
            vmem_limit_bytes=32 * 1024 * 1024,
        ),
        cost_estimate=pl.CostEstimate(
            flops=3 * n * num_gaussians,
            transcendentals=n * num_gaussians,
            bytes_accessed=4 * n * (num_gaussians + 1),
        ),
    )(dist_flat)

    return out


def gaussian_smearing_ref(dist, *, start=0.0, stop=5.0, num_gaussians=50):
    offset = jnp.linspace(start, stop, num_gaussians, dtype=jnp.float32)
    step = (stop - start) / (num_gaussians - 1)
    coeff = -0.5 / (step ** 2)
    d = jnp.reshape(dist, (-1, 1)).astype(jnp.float32) - offset.reshape(1, -1)
    return jnp.exp(coeff * d * d)


if __name__ == "__main__":
    key = jax.random.PRNGKey(0)
    # Small synthetic "edge distances": 200 edges, values in [0, 5).
    # Deliberately not a multiple of the tile / 128 to exercise the ragged
    # (masked) trailing block path.
    n_edges = 200
    dist = jax.random.uniform(key, (n_edges,), dtype=jnp.float32, minval=0.0, maxval=5.0)

    out = gaussian_smearing(dist)
    out = jax.block_until_ready(out)

    ref = gaussian_smearing_ref(dist)
    assert out.shape == (n_edges, 50), out.shape
    assert jnp.allclose(out, ref, atol=1e-5, rtol=1e-5), float(jnp.max(jnp.abs(out - ref)))

    print("KERNEL_OK")
</pallas_src>

<mosaic_0001>
module attributes {stable_mosaic.version = 11 : i64} {
  func.func @_gaussian_smearing_kernel(%arg0: i32, %arg1: memref<256x1xf32, #tpu.memory_space<vmem>>, %arg2: memref<256x50xf32, #tpu.memory_space<vmem>>) attributes {dimension_semantics = [#tpu.dimension_semantics<parallel>], iteration_bounds = array<i64: 1>, scalar_prefetch = 0 : i64, scratch_operands = 0 : i64, tpu.core_type = #tpu.core_type<tc>, window_params = [{transform_indices = @transform_0, window_bounds = array<i64: 256, 1>}, {transform_indices = @transform_1, window_bounds = array<i64: 256, 50>}]} {
    %0 = tpu.iota {dimensions = array<i32: 1>} : vector<1x50xi32>
    %1 = arith.sitofp %0 : vector<1x50xi32> to vector<1x50xf32>
    %cst = arith.constant 0.10204082 : f32
    %2 = vector.broadcast %cst : f32 to vector<1x50xf32>
    %3 = arith.mulf %2, %1 : vector<1x50xf32>
    %cst_0 = arith.constant 0.000000e+00 : f32
    %4 = vector.broadcast %cst_0 : f32 to vector<1x50xf32>
    %5 = arith.addf %4, %3 : vector<1x50xf32>
    %c0 = arith.constant 0 : index
    %c0_1 = arith.constant 0 : index
    %6 = vector.load %arg1[%c0, %c0_1] : memref<256x1xf32, #tpu.memory_space<vmem>>, vector<256x1xf32>
    %7 = vector.broadcast %6 : vector<256x1xf32> to vector<256x50xf32>
    %8 = vector.broadcast %5 : vector<1x50xf32> to vector<256x50xf32>
    %9 = arith.subf %7, %8 : vector<256x50xf32>
    %cst_2 = arith.constant -4.802000e+01 : f32
    %10 = vector.broadcast %cst_2 : f32 to vector<256x50xf32>
    %11 = arith.mulf %10, %9 : vector<256x50xf32>
    %12 = arith.mulf %11, %9 : vector<256x50xf32>
    %13 = math.exp %12 : vector<256x50xf32>
    %c0_3 = arith.constant 0 : index
    %c0_4 = arith.constant 0 : index
    %14 = vector.load %arg2[%c0_3, %c0_4] : memref<256x50xf32, #tpu.memory_space<vmem>>, vector<256x50xf32>
    tpu.vector_store %arg2[%c0_3, %c0_4], %13 {strides = array<i32>} : memref<256x50xf32, #tpu.memory_space<vmem>>, vector<256x50xf32>,
    return
  }
  func.func @transform_0(%arg0: i32) -> (i32, i32) {
    %c0_i32 = arith.constant 0 : i32
    %c0_i32_0 = arith.constant 0 : i32
    return %arg0, %c0_i32 : i32, i32
  }
  func.func @transform_1(%arg0: i32) -> (i32, i32) {
    %c0_i32 = arith.constant 0 : i32
    %c0_i32_0 = arith.constant 0 : i32
    return %arg0, %c0_i32 : i32, i32
  }
}

</mosaic_0001>

<llo_original>
// kernel: tpu_custom_call.1
$region0: #{tpu_custom_call.1}
  #allocation0 [shape = 'u32[]', space=smem, size = 0x4, offset = 0x4, fixed_abs, tag = 'smem constant byte address 0x4 - core index']
  #allocation1 [shape = 'u32[144,128]{1,0:T(1,128)}', space=vmem, size = 0x12000, scoped, tag = 'internal scratch']
  %s0 = inlined_call_operand.vmem [shape: f32[200,1], index: 0, kind: input, shape index: {}]
  %s1 = inlined_call_operand.vmem [shape: f32[200,50], index: 1, kind: output, shape index: {}]
  %s2 = sld [smem:[#allocation0]]
  $region48: #{tpu_custom_call.1} parent=0
    _
  %s4 = ssub.s32 1, %s2
  %s5 = scalar_select 0, %s4, %s2
  $region1: #{tpu_custom_call.1} parent=0
    #allocation2 [shape = 'u8[131072]{0}', space=vmem, size = 0x20000, scoped, tag = 'output window, operand 0, single buffered']
    // Predicated region
    $region2: #{tpu_custom_call.1} parent=1 // pred_check
      _
    $region3: #{tpu_custom_call.1} parent=1 // pred_check_branch
      %7 = sbr.rel (0) target = $region5
    $region4: #{tpu_custom_call.1} parent=1 // pred_region
      _
    $region5: #{tpu_custom_call.1} parent=1 // pred_fallthru
      _
    %v8 = vlaneseq
    %v9 = vand.u32 %v8, 127
    %v10 = vcvt.s32.f32 %v9
    %v11 = vmul.f32 %v10, 0.10204082
    %v12 = vadd.f32 %v11, 0.0
    %v13 = vld [vmem:[%s0] sm:$0xff]
    %v14 = vld [vmem:[%s0 + $0x8] sm:$0xff]
    %v15 = vld [vmem:[%s0 + $0x10] sm:$0xff]
    %v16 = vld [vmem:[%s0 + $0x18] sm:$0xff]
    %v17 = vld [vmem:[%s0 + $0x20] sm:$0xff]
    %v18 = vld [vmem:[%s0 + $0x28] sm:$0xff]
    %v19 = vld [vmem:[%s0 + $0x30] sm:$0xff]
    %v20 = vld [vmem:[%s0 + $0x38] sm:$0xff]
    %v21 = vld [vmem:[%s0 + $0x40] sm:$0xff]
    %v22 = vld [vmem:[%s0 + $0x48] sm:$0xff]
    %v23 = vld [vmem:[%s0 + $0x50] sm:$0xff]
    %v24 = vld [vmem:[%s0 + $0x58] sm:$0xff]
    %v25 = vld [vmem:[%s0 + $0x60] sm:$0xff]
    %v26 = vld [vmem:[%s0 + $0x68] sm:$0xff]
    %v27 = vld [vmem:[%s0 + $0x70] sm:$0xff]
    %v28 = vld [vmem:[%s0 + $0x78] sm:$0xff]
    %v29 = vld [vmem:[%s0 + $0x80] sm:$0xff]
    %v30 = vld [vmem:[%s0 + $0x88] sm:$0xff]
    %v31 = vld [vmem:[%s0 + $0x90] sm:$0xff]
    %v32 = vld [vmem:[%s0 + $0x98] sm:$0xff]
    %v33 = vld [vmem:[%s0 + $0xa0] sm:$0xff]
    %v34 = vld [vmem:[%s0 + $0xa8] sm:$0xff]
    %v35 = vld [vmem:[%s0 + $0xb0] sm:$0xff]
    %v36 = vld [vmem:[%s0 + $0xb8] sm:$0xff]
    %v37 = vld [vmem:[%s0 + $0xc0] sm:$0xff]
    %v38 = vld [vmem:[%s0 + $0xc8] sm:$0xff]
    %v39 = vld [vmem:[%s0 + $0xd0] sm:$0xff]
    %v40 = vld [vmem:[%s0 + $0xd8] sm:$0xff]
    %v41 = vld [vmem:[%s0 + $0xe0] sm:$0xff]
    %v42 = vld [vmem:[%s0 + $0xe8] sm:$0xff]
    %v43 = vld [vmem:[%s0 + $0xf0] sm:$0xff]
    %v44 = vld [vmem:[%s0 + $0xf8] sm:$0xff]
    %46 = vset.pattern.permute.xlu0 0
    %47 = vperm.xlu0 %46, %v13
    %v48 = vpop.permute.xlu0 %47
    %51 = vset.pattern.permute.xlu0 0
    %52 = vperm.xlu0 %51, %v14
    %v53 = vpop.permute.xlu0 %52
    %56 = vset.pattern.permute.xlu0 0
    %57 = vperm.xlu0 %56, %v15
    %v58 = vpop.permute.xlu0 %57
    %61 = vset.pattern.permute.xlu0 0
    %62 = vperm.xlu0 %61, %v16
    %v63 = vpop.permute.xlu0 %62
    %66 = vset.pattern.permute.xlu0 0
    %67 = vperm.xlu0 %66, %v17
    %v68 = vpop.permute.xlu0 %67
    %71 = vset.pattern.permute.xlu0 0
    %72 = vperm.xlu0 %71, %v18
    %v73 = vpop.permute.xlu0 %72
    %76 = vset.pattern.permute.xlu0 0
    %77 = vperm.xlu0 %76, %v19
    %v78 = vpop.permute.xlu0 %77
    %81 = vset.pattern.permute.xlu0 0
    %82 = vperm.xlu0 %81, %v20
    %v83 = vpop.permute.xlu0 %82
    %86 = vset.pattern.permute.xlu0 0
    %87 = vperm.xlu0 %86, %v21
    %v88 = vpop.permute.xlu0 %87
    %91 = vset.pattern.permute.xlu0 0
    %92 = vperm.xlu0 %91, %v22
    %v93 = vpop.permute.xlu0 %92
    %96 = vset.pattern.permute.xlu0 0
    %97 = vperm.xlu0 %96, %v23
    %v98 = vpop.permute.xlu0 %97
    %101 = vset.pattern.permute.xlu0 0
    %102 = vperm.xlu0 %101, %v24
    %v103 = vpop.permute.xlu0 %102
    %106 = vset.pattern.permute.xlu0 0
    %107 = vperm.xlu0 %106, %v25
    %v108 = vpop.permute.xlu0 %107
    %111 = vset.pattern.permute.xlu0 0
    %112 = vperm.xlu0 %111, %v26
    %v113 = vpop.permute.xlu0 %112
    %116 = vset.pattern.permute.xlu0 0
    %117 = vperm.xlu0 %116, %v27
    %v118 = vpop.permute.xlu0 %117
    %121 = vset.pattern.permute.xlu0 0
    %122 = vperm.xlu0 %121, %v28
    %v123 = vpop.permute.xlu0 %122
    %126 = vset.pattern.permute.xlu0 0
    %127 = vperm.xlu0 %126, %v29
    %v128 = vpop.permute.xlu0 %127
    %131 = vset.pattern.permute.xlu0 0
    %132 = vperm.xlu0 %131, %v30
    %v133 = vpop.permute.xlu0 %132
    %136 = vset.pattern.permute.xlu0 0
    %137 = vperm.xlu0 %136, %v31
    %v138 = vpop.permute.xlu0 %137
    %141 = vset.pattern.permute.xlu0 0
    %142 = vperm.xlu0 %141, %v32
    %v143 = vpop.permute.xlu0 %142
    %146 = vset.pattern.permute.xlu0 0
    %147 = vperm.xlu0 %146, %v33
    %v148 = vpop.permute.xlu0 %147
    %151 = vset.pattern.permute.xlu0 0
    %152 = vperm.xlu0 %151, %v34
    %v153 = vpop.permute.xlu0 %152
    %156 = vset.pattern.permute.xlu0 0
    %157 = vperm.xlu0 %156, %v35
    %v158 = vpop.permute.xlu0 %157
    %161 = vset.pattern.permute.xlu0 0
    %162 = vperm.xlu0 %161, %v36
    %v163 = vpop.permute.xlu0 %162
    %166 = vset.pattern.permute.xlu0 0
    %167 = vperm.xlu0 %166, %v37
    %v168 = vpop.permute.xlu0 %167
    %171 = vset.pattern.permute.xlu0 0
    %172 = vperm.xlu0 %171, %v38
    %v173 = vpop.permute.xlu0 %172
    %176 = vset.pattern.permute.xlu0 0
    %177 = vperm.xlu0 %176, %v39
    %v178 = vpop.permute.xlu0 %177
    %181 = vset.pattern.permute.xlu0 0
    %182 = vperm.xlu0 %181, %v40
    %v183 = vpop.permute.xlu0 %182
    %186 = vset.pattern.permute.xlu0 0
    %187 = vperm.xlu0 %186, %v41
    %v188 = vpop.permute.xlu0 %187
    %191 = vset.pattern.permute.xlu0 0
    %192 = vperm.xlu0 %191, %v42
    %v193 = vpop.permute.xlu0 %192
    %196 = vset.pattern.permute.xlu0 0
    %197 = vperm.xlu0 %196, %v43
    %v198 = vpop.permute.xlu0 %197
    %201 = vset.pattern.permute.xlu0 0
    %202 = vperm.xlu0 %201, %v44
    %v203 = vpop.permute.xlu0 %202
    %v205 = vsub.f32 %v48, %v12
    %v206 = vsub.f32 %v53, %v12
    %v207 = vsub.f32 %v58, %v12
    %v208 = vsub.f32 %v63, %v12
    %v209 = vsub.f32 %v68, %v12
    %v210 = vsub.f32 %v73, %v12
    %v211 = vsub.f32 %v78, %v12
    %v212 = vsub.f32 %v83, %v12
    %v213 = vsub.f32 %v88, %v12
    %v214 = vsub.f32 %v93, %v12
    %v215 = vsub.f32 %v98, %v12
    %v216 = vsub.f32 %v103, %v12
    %v217 = vsub.f32 %v108, %v12
    %v218 = vsub.f32 %v113, %v12
    %v219 = vsub.f32 %v118, %v12
    %v220 = vsub.f32 %v123, %v12
    %v221 = vsub.f32 %v128, %v12
    %v222 = vsub.f32 %v133, %v12
    %v223 = vsub.f32 %v138, %v12
    %v224 = vsub.f32 %v143, %v12
    %v225 = vsub.f32 %v148, %v12
    %v226 = vsub.f32 %v153, %v12
    %v227 = vsub.f32 %v158, %v12
    %v228 = vsub.f32 %v163, %v12
    %v229 = vsub.f32 %v168, %v12
    %v230 = vsub.f32 %v173, %v12
    %v231 = vsub.f32 %v178, %v12
    %v232 = vsub.f32 %v183, %v12
    %v233 = vsub.f32 %v188, %v12
    %v234 = vsub.f32 %v193, %v12
    %v235 = vsub.f32 %v198, %v12
    %v236 = vsub.f32 %v203, %v12
    %v237 = vmul.f32 %v205, -48.02
    %v238 = vmul.f32 %v206, -48.02
    %v239 = vmul.f32 %v207, -48.02
    %v240 = vmul.f32 %v208, -48.02
    %v241 = vmul.f32 %v209, -48.02
    %v242 = vmul.f32 %v210, -48.02
    %v243 = vmul.f32 %v211, -48.02
    %v244 = vmul.f32 %v212, -48.02
    %v245 = vmul.f32 %v213, -48.02
    %v246 = vmul.f32 %v214, -48.02
    %v247 = vmul.f32 %v215, -48.02
    %v248 = vmul.f32 %v216, -48.02
    %v249 = vmul.f32 %v217, -48.02
    %v250 = vmul.f32 %v218, -48.02
    %v251 = vmul.f32 %v219, -48.02
    %v252 = vmul.f32 %v220, -48.02
    %v253 = vmul.f32 %v221, -48.02
    %v254 = vmul.f32 %v222, -48.02
    %v255 = vmul.f32 %v223, -48.02
    %v256 = vmul.f32 %v224, -48.02
    %v257 = vmul.f32 %v225, -48.02
    %v258 = vmul.f32 %v226, -48.02
    %v259 = vmul.f32 %v227, -48.02
    %v260 = vmul.f32 %v228, -48.02
    %v261 = vmul.f32 %v229, -48.02
    %v262 = vmul.f32 %v230, -48.02
    %v263 = vmul.f32 %v231, -48.02
    %v264 = vmul.f32 %v232, -48.02
    %v265 = vmul.f32 %v233, -48.02
    %v266 = vmul.f32 %v234, -48.02
    %v267 = vmul.f32 %v235, -48.02
    %v268 = vmul.f32 %v236, -48.02
    %v269 = vmul.f32 %v237, %v205
    %v270 = vmul.f32 %v238, %v206
    %v271 = vmul.f32 %v239, %v207
    %v272 = vmul.f32 %v240, %v208
    %v273 = vmul.f32 %v241, %v209
    %v274 = vmul.f32 %v242, %v210
    %v275 = vmul.f32 %v243, %v211
    %v276 = vmul.f32 %v244, %v212
    %v277 = vmul.f32 %v245, %v213
    %v278 = vmul.f32 %v246, %v214
    %v279 = vmul.f32 %v247, %v215
    %v280 = vmul.f32 %v248, %v216
    %v281 = vmul.f32 %v249, %v217
    %v282 = vmul.f32 %v250, %v218
    %v283 = vmul.f32 %v251, %v219
    %v284 = vmul.f32 %v252, %v220
    %v285 = vmul.f32 %v253, %v221
    %v286 = vmul.f32 %v254, %v222
    %v287 = vmul.f32 %v255, %v223
    %v288 = vmul.f32 %v256, %v224
    %v289 = vmul.f32 %v257, %v225
    %v290 = vmul.f32 %v258, %v226
    %v291 = vmul.f32 %v259, %v227
    %v292 = vmul.f32 %v260, %v228
    %v293 = vmul.f32 %v261, %v229
    %v294 = vmul.f32 %v262, %v230
    %v295 = vmul.f32 %v263, %v231
    %v296 = vmul.f32 %v264, %v232
    %v297 = vmul.f32 %v265, %v233
    %v298 = vmul.f32 %v266, %v234
    %v299 = vmul.f32 %v267, %v235
    %v300 = vmul.f32 %v268, %v236
    %v301 = vmul.f32 %v269, 1.442695
    %v302 = vpow.pop %v301
    %v303 = vmul.f32 %v270, 1.442695
    %v304 = vpow.pop %v303
    %v305 = vmul.f32 %v271, 1.442695
    %v306 = vpow.pop %v305
    %v307 = vmul.f32 %v272, 1.442695
    %v308 = vpow.pop %v307
    %v309 = vmul.f32 %v273, 1.442695
    %v310 = vpow.pop %v309
    %v311 = vmul.f32 %v274, 1.442695
    %v312 = vpow.pop %v311
    %v313 = vmul.f32 %v275, 1.442695
    %v314 = vpow.pop %v313
    %v315 = vmul.f32 %v276, 1.442695
    %v316 = vpow.pop %v315
    %v317 = vmul.f32 %v277, 1.442695
    %v318 = vpow.pop %v317
    %v319 = vmul.f32 %v278, 1.442695
    %v320 = vpow.pop %v319
    %v321 = vmul.f32 %v279, 1.442695
    %v322 = vpow.pop %v321
    %v323 = vmul.f32 %v280, 1.442695
    %v324 = vpow.pop %v323
    %v325 = vmul.f32 %v281, 1.442695
    %v326 = vpow.pop %v325
    %v327 = vmul.f32 %v282, 1.442695
    %v328 = vpow.pop %v327
    %v329 = vmul.f32 %v283, 1.442695
    %v330 = vpow.pop %v329
    %v331 = vmul.f32 %v284, 1.442695
    %v332 = vpow.pop %v331
    %v333 = vmul.f32 %v285, 1.442695
    %v334 = vpow.pop %v333
    %v335 = vmul.f32 %v286, 1.442695
    %v336 = vpow.pop %v335
    %v337 = vmul.f32 %v287, 1.442695
    %v338 = vpow.pop %v337
    %v339 = vmul.f32 %v288, 1.442695
    %v340 = vpow.pop %v339
    %v341 = vmul.f32 %v289, 1.442695
    %v342 = vpow.pop %v341
    %v343 = vmul.f32 %v290, 1.442695
    %v344 = vpow.pop %v343
    %v345 = vmul.f32 %v291, 1.442695
    %v346 = vpow.pop %v345
    %v347 = vmul.f32 %v292, 1.442695
    %v348 = vpow.pop %v347
    %v349 = vmul.f32 %v293, 1.442695
    %v350 = vpow.pop %v349
    %v351 = vmul.f32 %v294, 1.442695
    %v352 = vpow.pop %v351
    %v353 = vmul.f32 %v295, 1.442695
    %v354 = vpow.pop %v353
    %v355 = vmul.f32 %v296, 1.442695
    %v356 = vpow.pop %v355
    %v357 = vmul.f32 %v297, 1.442695
    %v358 = vpow.pop %v357
    %v359 = vmul.f32 %v298, 1.442695
    %v360 = vpow.pop %v359
    %v361 = vmul.f32 %v299, 1.442695
    %v362 = vpow.pop %v361
    %v363 = vmul.f32 %v300, 1.442695
    %v364 = vpow.pop %v363
    %vm365 = vcmask 408576
    %366 = vst.msk [vmem:[#allocation2] sm:$0xff] %vm365, %v302
    %367 = vst.msk [vmem:[#allocation2 + $0x8] sm:$0xff] %vm365, %v304
    %368 = vst.msk [vmem:[#allocation2 + $0x10] sm:$0xff] %vm365, %v306
    %369 = vst.msk [vmem:[#allocation2 + $0x18] sm:$0xff] %vm365, %v308
    %370 = vst.msk [vmem:[#allocation2 + $0x20] sm:$0xff] %vm365, %v310
    %371 = vst.msk [vmem:[#allocation2 + $0x28] sm:$0xff] %vm365, %v312
    %372 = vst.msk [vmem:[#allocation2 + $0x30] sm:$0xff] %vm365, %v314
    %373 = vst.msk [vmem:[#allocation2 + $0x38] sm:$0xff] %vm365, %v316
    %374 = vst.msk [vmem:[#allocation2 + $0x40] sm:$0xff] %vm365, %v318
    %375 = vst.msk [vmem:[#allocation2 + $0x48] sm:$0xff] %vm365, %v320
    %376 = vst.msk [vmem:[#allocation2 + $0x50] sm:$0xff] %vm365, %v322
    %377 = vst.msk [vmem:[#allocation2 + $0x58] sm:$0xff] %vm365, %v324
    %378 = vst.msk [vmem:[#allocation2 + $0x60] sm:$0xff] %vm365, %v326
    %379 = vst.msk [vmem:[#allocation2 + $0x68] sm:$0xff] %vm365, %v328
    %380 = vst.msk [vmem:[#allocation2 + $0x70] sm:$0xff] %vm365, %v330
    %381 = vst.msk [vmem:[#allocation2 + $0x78] sm:$0xff] %vm365, %v332
    %382 = vst.msk [vmem:[#allocation2 + $0x80] sm:$0xff] %vm365, %v334
    %383 = vst.msk [vmem:[#allocation2 + $0x88] sm:$0xff] %vm365, %v336
    %384 = vst.msk [vmem:[#allocation2 + $0x90] sm:$0xff] %vm365, %v338
    %385 = vst.msk [vmem:[#allocation2 + $0x98] sm:$0xff] %vm365, %v340
    %386 = vst.msk [vmem:[#allocation2 + $0xa0] sm:$0xff] %vm365, %v342
    %387 = vst.msk [vmem:[#allocation2 + $0xa8] sm:$0xff] %vm365, %v344
    %388 = vst.msk [vmem:[#allocation2 + $0xb0] sm:$0xff] %vm365, %v346
    %389 = vst.msk [vmem:[#allocation2 + $0xb8] sm:$0xff] %vm365, %v348
    %390 = vst.msk [vmem:[#allocation2 + $0xc0] sm:$0xff] %vm365, %v350
    %391 = vst.msk [vmem:[#allocation2 + $0xc8] sm:$0xff] %vm365, %v352
    %392 = vst.msk [vmem:[#allocation2 + $0xd0] sm:$0xff] %vm365, %v354
    %393 = vst.msk [vmem:[#allocation2 + $0xd8] sm:$0xff] %vm365, %v356
    %394 = vst.msk [vmem:[#allocation2 + $0xe0] sm:$0xff] %vm365, %v358
    %395 = vst.msk [vmem:[#allocation2 + $0xe8] sm:$0xff] %vm365, %v360
    %396 = vst.msk [vmem:[#allocation2 + $0xf0] sm:$0xff] %vm365, %v362
    %397 = vst.msk [vmem:[#allocation2 + $0xf8] sm:$0xff] %vm365, %v364
    // Predicated region
    $region6: #{tpu_custom_call.1} parent=1 // pred_check
      _
    $region7: #{tpu_custom_call.1} parent=1 // pred_check_branch
      %399 = sbr.rel (0) target = $region9
    $region8: #{tpu_custom_call.1} parent=1 // pred_region
      // Predicated region
      $region10: #{tpu_custom_call.1} parent=8 // pred_check
        _
      $region11: #{tpu_custom_call.1} parent=8 // pred_check_branch
        %401 = sbr.rel (0) target = $region13
      $region12: #{tpu_custom_call.1} parent=8 // pred_region
        // Predicated region
        $region14: #{tpu_custom_call.1} parent=12 // pred_check
          _
        $region15: #{tpu_custom_call.1} parent=12 // pred_check_branch
          %403 = sbr.rel (0) target = $region17
        $region16: #{tpu_custom_call.1} parent=12 // pred_region
          // Predicated region
          $region29: #{tpu_custom_call.1} parent=16 // pred_check
            _
          $region30: #{tpu_custom_call.1} parent=16 // pred_check_branch
            %467 = sbr.rel (0) target = $region32
          $region31: #{tpu_custom_call.1} parent=16 // pred_region
            loop: start=0, step=1, limit=1
            $region33: #{tpu_custom_call.1} parent=31 // loop_pre_header
              _
            $region34: #{tpu_custom_call.1} parent=31 // loop_header
              %s469 = sphi 0, %s473
              %p470 = scmp.ge.s32.totalorder %s469, 1
              %s474 = sphi [#allocation2], [#allocation2]
              %s475 = sphi %s1, %s1
            $region35: #{tpu_custom_call.1} parent=31 // loop_header_branch
              %472 = sbr.rel (%p470) target = $region39
            $region36: #{tpu_custom_call.1} parent=31 // loop_body
              %v476 = vld [vmem:[%s474] sm:$0xff]
              %477 = vst [vmem:[%s475] sm:$0xff] %v476
              %v478 = vld [vmem:[%s474 + $0x8] sm:$0xff]
              %479 = vst [vmem:[%s475 + $0x8] sm:$0xff] %v478
              %v480 = vld [vmem:[%s474 + $0x10] sm:$0xff]
              %481 = vst [vmem:[%s475 + $0x10] sm:$0xff] %v480
              %v482 = vld [vmem:[%s474 + $0x18] sm:$0xff]
              %483 = vst [vmem:[%s475 + $0x18] sm:$0xff] %v482
              %v484 = vld [vmem:[%s474 + $0x20] sm:$0xff]
              %485 = vst [vmem:[%s475 + $0x20] sm:$0xff] %v484
              %v486 = vld [vmem:[%s474 + $0x28] sm:$0xff]
              %487 = vst [vmem:[%s475 + $0x28] sm:$0xff] %v486
              %v488 = vld [vmem:[%s474 + $0x30] sm:$0xff]
              %489 = vst [vmem:[%s475 + $0x30] sm:$0xff] %v488
              %v490 = vld [vmem:[%s474 + $0x38] sm:$0xff]
              %491 = vst [vmem:[%s475 + $0x38] sm:$0xff] %v490
              %v492 = vld [vmem:[%s474 + $0x40] sm:$0xff]
              %493 = vst [vmem:[%s475 + $0x40] sm:$0xff] %v492
              %v494 = vld [vmem:[%s474 + $0x48] sm:$0xff]
              %495 = vst [vmem:[%s475 + $0x48] sm:$0xff] %v494
              %v496 = vld [vmem:[%s474 + $0x50] sm:$0xff]
              %497 = vst [vmem:[%s475 + $0x50] sm:$0xff] %v496
              %v498 = vld [vmem:[%s474 + $0x58] sm:$0xff]
              %499 = vst [vmem:[%s475 + $0x58] sm:$0xff] %v498
              %v500 = vld [vmem:[%s474 + $0x60] sm:$0xff]
              %501 = vst [vmem:[%s475 + $0x60] sm:$0xff] %v500
              %v502 = vld [vmem:[%s474 + $0x68] sm:$0xff]
              %503 = vst [vmem:[%s475 + $0x68] sm:$0xff] %v502
              %v504 = vld [vmem:[%s474 + $0x70] sm:$0xff]
              %505 = vst [vmem:[%s475 + $0x70] sm:$0xff] %v504
              %v506 = vld [vmem:[%s474 + $0x78] sm:$0xff]
              %507 = vst [vmem:[%s475 + $0x78] sm:$0xff] %v506
              %v508 = vld [vmem:[%s474 + $0x80] sm:$0xff]
              %509 = vst [vmem:[%s475 + $0x80] sm:$0xff] %v508
              %v510 = vld [vmem:[%s474 + $0x88] sm:$0xff]
              %511 = vst [vmem:[%s475 + $0x88] sm:$0xff] %v510
              %v512 = vld [vmem:[%s474 + $0x90] sm:$0xff]
              %513 = vst [vmem:[%s475 + $0x90] sm:$0xff] %v512
              %v514 = vld [vmem:[%s474 + $0x98] sm:$0xff]
              %515 = vst [vmem:[%s475 + $0x98] sm:$0xff] %v514
              %v516 = vld [vmem:[%s474 + $0xa0] sm:$0xff]
              %517 = vst [vmem:[%s475 + $0xa0] sm:$0xff] %v516
              %v518 = vld [vmem:[%s474 + $0xa8] sm:$0xff]
              %519 = vst [vmem:[%s475 + $0xa8] sm:$0xff] %v518
              %v520 = vld [vmem:[%s474 + $0xb0] sm:$0xff]
              %521 = vst [vmem:[%s475 + $0xb0] sm:$0xff] %v520
              %v522 = vld [vmem:[%s474 + $0xb8] sm:$0xff]
              %523 = vst [vmem:[%s475 + $0xb8] sm:$0xff] %v522
              %v524 = vld [vmem:[%s474 + $0xc0] sm:$0xff]
              %525 = vst [vmem:[%s475 + $0xc0] sm:$0xff] %v524
            $region37: #{tpu_custom_call.1} parent=31 // loop_footer
              %s473 = sadd.s32 1, %s469
            $region38: #{tpu_custom_call.1} parent=31 // loop_footer_branch
              %468 = sbr.rel target = $region34
            $region39: #{tpu_custom_call.1} parent=31 // loop_exit
              _
          $region32: #{tpu_custom_call.1} parent=16 // pred_fallthru
            _
          // Predicated region
          $region40: #{tpu_custom_call.1} parent=16 // pred_check
            _
          $region41: #{tpu_custom_call.1} parent=16 // pred_check_branch
            %527 = sbr.rel target = $region43
          $region42: #{tpu_custom_call.1} parent=16 // pred_region
            _
          $region43: #{tpu_custom_call.1} parent=16 // pred_fallthru
            _
        $region17: #{tpu_custom_call.1} parent=12 // pred_fallthru
          _
        // Predicated region
        $region18: #{tpu_custom_call.1} parent=12 // pred_check
          _
        $region19: #{tpu_custom_call.1} parent=12 // pred_check_branch
          %405 = sbr.rel target = $region21
        $region20: #{tpu_custom_call.1} parent=12 // pred_region
          %s407 = ssub.s32 256, 1
          loop: start=0, step=1, limit=1
          $region22: #{tpu_custom_call.1} parent=20 // loop_pre_header
            _
          $region23: #{tpu_custom_call.1} parent=20 // loop_header
            %s409 = sphi 0, %s413
            %p410 = scmp.ge.s32.totalorder %s409, 1
            %s414 = sphi [#allocation2], [#allocation2]
            %s415 = sphi %s1, %s1
          $region24: #{tpu_custom_call.1} parent=20 // loop_header_branch
            %412 = sbr.rel (%p410) target = $region28
          $region25: #{tpu_custom_call.1} parent=20 // loop_body
            %v416 = vld [vmem:[%s414] sm:%s407]
            %417 = vst [vmem:[%s415] sm:%s407] %v416
            %v418 = vld [vmem:[%s414 + $0x8] sm:%s407]
            %419 = vst [vmem:[%s415 + $0x8] sm:%s407] %v418
            %v420 = vld [vmem:[%s414 + $0x10] sm:%s407]
            %421 = vst [vmem:[%s415 + $0x10] sm:%s407] %v420
            %v422 = vld [vmem:[%s414 + $0x18] sm:%s407]
            %423 = vst [vmem:[%s415 + $0x18] sm:%s407] %v422
            %v424 = vld [vmem:[%s414 + $0x20] sm:%s407]
            %425 = vst [vmem:[%s415 + $0x20] sm:%s407] %v424
            %v426 = vld [vmem:[%s414 + $0x28] sm:%s407]
            %427 = vst [vmem:[%s415 + $0x28] sm:%s407] %v426
            %v428 = vld [vmem:[%s414 + $0x30] sm:%s407]
            %429 = vst [vmem:[%s415 + $0x30] sm:%s407] %v428
            %v430 = vld [vmem:[%s414 + $0x38] sm:%s407]
            %431 = vst [vmem:[%s415 + $0x38] sm:%s407] %v430
            %v432 = vld [vmem:[%s414 + $0x40] sm:%s407]
            %433 = vst [vmem:[%s415 + $0x40] sm:%s407] %v432
            %v434 = vld [vmem:[%s414 + $0x48] sm:%s407]
            %435 = vst [vmem:[%s415 + $0x48] sm:%s407] %v434
            %v436 = vld [vmem:[%s414 + $0x50] sm:%s407]
            %437 = vst [vmem:[%s415 + $0x50] sm:%s407] %v436
            %v438 = vld [vmem:[%s414 + $0x58] sm:%s407]
            %439 = vst [vmem:[%s415 + $0x58] sm:%s407] %v438
            %v440 = vld [vmem:[%s414 + $0x60] sm:%s407]
            %441 = vst [vmem:[%s415 + $0x60] sm:%s407] %v440
            %v442 = vld [vmem:[%s414 + $0x68] sm:%s407]
            %443 = vst [vmem:[%s415 + $0x68] sm:%s407] %v442
            %v444 = vld [vmem:[%s414 + $0x70] sm:%s407]
            %445 = vst [vmem:[%s415 + $0x70] sm:%s407] %v444
            %v446 = vld [vmem:[%s414 + $0x78] sm:%s407]
            %447 = vst [vmem:[%s415 + $0x78] sm:%s407] %v446
            %v448 = vld [vmem:[%s414 + $0x80] sm:%s407]
            %449 = vst [vmem:[%s415 + $0x80] sm:%s407] %v448
            %v450 = vld [vmem:[%s414 + $0x88] sm:%s407]
            %451 = vst [vmem:[%s415 + $0x88] sm:%s407] %v450
            %v452 = vld [vmem:[%s414 + $0x90] sm:%s407]
            %453 = vst [vmem:[%s415 + $0x90] sm:%s407] %v452
            %v454 = vld [vmem:[%s414 + $0x98] sm:%s407]
            %455 = vst [vmem:[%s415 + $0x98] sm:%s407] %v454
            %v456 = vld [vmem:[%s414 + $0xa0] sm:%s407]
            %457 = vst [vmem:[%s415 + $0xa0] sm:%s407] %v456
            %v458 = vld [vmem:[%s414 + $0xa8] sm:%s407]
            %459 = vst [vmem:[%s415 + $0xa8] sm:%s407] %v458
            %v460 = vld [vmem:[%s414 + $0xb0] sm:%s407]
            %461 = vst [vmem:[%s415 + $0xb0] sm:%s407] %v460
            %v462 = vld [vmem:[%s414 + $0xb8] sm:%s407]
            %463 = vst [vmem:[%s415 + $0xb8] sm:%s407] %v462
            %v464 = vld [vmem:[%s414 + $0xc0] sm:%s407]
            %465 = vst [vmem:[%s415 + $0xc0] sm:%s407] %v464
          $region26: #{tpu_custom_call.1} parent=20 // loop_footer
            %s413 = sadd.s32 1, %s409
          $region27: #{tpu_custom_call.1} parent=20 // loop_footer_branch
            %408 = sbr.rel target = $region23
          $region28: #{tpu_custom_call.1} parent=20 // loop_exit
            _
        $region21: #{tpu_custom_call.1} parent=12 // pred_fallthru
          _
      $region13: #{tpu_custom_call.1} parent=8 // pred_fallthru
        _
      %528 = vnop
    $region9: #{tpu_custom_call.1} parent=1 // pred_fallthru
      _
    // Predicated region
    $region44: #{tpu_custom_call.1} parent=1 // pred_check
      _
    $region45: #{tpu_custom_call.1} parent=1 // pred_check_branch
      %530 = sbr.rel (0) target = $region47
    $region46: #{tpu_custom_call.1} parent=1 // pred_region
      _
    $region47: #{tpu_custom_call.1} parent=1 // pred_fallthru
      _

</llo_original>
